<compile_context>
chip_gen: v5e
topology: v5e:2x2
jax: 0.10.0
libtpu: 0.0.40
codegen_flags: <defaults>
</compile_context>

<pallas_src>
import jax
import jax.numpy as jnp
from jax.experimental import pallas as pl
from jax.experimental.pallas import tpu as pltpu

_MIB = 1024 * 1024


# ---------------------------------------------------------------------------
# Hardware-aware sizing helpers
# ---------------------------------------------------------------------------
def _vmem_budget_and_limit():
    """(tiling budget, vmem_limit_bytes) sized per TPU generation."""
    cap = 64 * _MIB
    try:
        cap = int(getattr(pltpu.get_tpu_info(), "vmem_capacity_bytes", cap))
    except Exception:
        pass
    if cap >= 96 * _MIB:            # 128-MiB VMEM parts (v5e / v6e)
        limit = 80 * _MIB
    elif cap >= 48 * _MIB:          # 64-MiB per-TC parts (v7x)
        limit = 40 * _MIB
    else:                           # older / smaller parts: stay well inside
        limit = max(cap // 2, 8 * _MIB)
    budget = (limit * 3) // 5       # double-buffer footprint target (~48 / ~24 MiB)
    return budget, limit


def _pick_hw_tile(HWp, C, B, itemsize, budget):
    """Lane tile T along the (padded) HW axis.

    Bytes-targeted: aim for ~4 MiB per tile buffer (HBM-roofline plateau),
    capped so 2 input + 2 output double-buffers fit `budget`, capped at 8192
    lanes, and a divisor of HWp so every store stays lane-dense."""
    bytes_per_col = max(C * itemsize, 1)
    target_t = (4 * _MIB) // bytes_per_col           # ~4 MiB per buffer
    vmem_t = budget // (4 * bytes_per_col)            # 2 in + 2 out buffers
    t = min(HWp, 8192, target_t, vmem_t)
    t = max(128, (t // 128) * 128)
    if B == 1 and HWp >= 256:
        # Only when batch == 1: keep >= 2 HW grid steps so the DMA pipeline
        # (and v7x megacore split) has something to overlap.
        t = min(t, max(128, ((HWp // 2) // 128) * 128))
    while HWp % t != 0:                                # HWp is a multiple of 128
        t -= 128
    return t


# ---------------------------------------------------------------------------
# Kernels
# ---------------------------------------------------------------------------
def _sse_logits(x, ws_ref, bias, use_mxu):
    """Per-pixel sSE logit (1, T) in f32 from an (C, T) tile."""
    if use_mxu:
        # (1, C) @ (C, T) on the otherwise-idle MXU; x stays in its native dtype.
        return jnp.dot(ws_ref[...].astype(x.dtype), x,
                       preferred_element_type=jnp.float32) + bias
    # Small C: VPU broadcast-multiply + XLU sublane reduce. ws_ref is (C, 1).
    return jnp.sum(x.astype(jnp.float32) * ws_ref[...],
                   axis=0, keepdims=True) + bias


def _make_streaming_kernel(use_mxu):
    def kernel(x_ref, cse_ref, ws_ref, bs_ref, o_ref):
        # x_ref/o_ref: (C, T) native dtype; cse_ref: (C, 1) f32;
        # ws_ref: (1, C) or (C, 1) f32; bs_ref: (1,) f32 scalar in SMEM.
        x = x_ref[...]
        s = _sse_logits(x, ws_ref, bs_ref[0], use_mxu)          # (1, T)
        gate = cse_ref[...] + jax.nn.sigmoid(s)                  # (C, T) f32
        o_ref[...] = (x * gate.astype(x.dtype)).astype(o_ref.dtype)
    return kernel


def _make_fused_kernel(inv_hw, use_mxu):
    def kernel(x_ref, w1_ref, b1_ref, w2t_ref, b2c_ref, ws_ref, bs_ref, o_ref):
        # x_ref/o_ref: (C, HWp), one batch resident in VMEM (read HBM only once).
        # w1: (C, Cr), b1: (1, Cr), w2t: (C, Cr), b2c: (C, 1), ws: (1,C)|(C,1), bs: (1,) SMEM.
        x = x_ref[...]
        x32 = x.astype(jnp.float32)

        # cSE: global average pool (padding columns are zero; divide by real HW).
        mean_col = jnp.sum(x32, axis=1, keepdims=True) * inv_hw            # (C, 1)
        h_row = jnp.sum(mean_col * w1_ref[...], axis=0, keepdims=True) + b1_ref[...]
        h_row = jnp.maximum(h_row, 0.0)                                    # (1, Cr)
        cse_col = jax.nn.sigmoid(
            jnp.sum(w2t_ref[...] * h_row, axis=1, keepdims=True) + b2c_ref[...])  # (C, 1)

        # sSE + fused gating: x * (cSE + sSE)
        s = _sse_logits(x, ws_ref, bs_ref[0], use_mxu)                     # (1, HWp)
        gate = cse_col + jax.nn.sigmoid(s)                                 # (C, HWp)
        o_ref[...] = (x * gate.astype(x.dtype)).astype(o_ref.dtype)
    return kernel


# ---------------------------------------------------------------------------
# Wrapper
# ---------------------------------------------------------------------------
def scse_attention(x_nchw, params, *, force_streaming=False):
    """SCSE attention: x * cSE(x) + x * sSE(x). NCHW in / NCHW out, dtype-preserving."""
    w1, b1, w2, b2, ws, bs = params
    B, C, H, W = x_nchw.shape
    HW = H * W
    HWp = ((HW + 127) // 128) * 128                 # lane-dense padded HW
    itemsize = jnp.dtype(x_nchw.dtype).itemsize
    budget, vmem_limit = _vmem_budget_and_limit()

    x = x_nchw.reshape(B, C, HW)                    # native layout, no transpose
    x_k = x if HWp == HW else jnp.pad(x, ((0, 0), (0, 0), (0, HWp - HW)))

    use_mxu = C >= 128                              # sSE reduce on MXU for wide channels
    ws_f = (ws.reshape(1, C) if use_mxu else ws.reshape(C, 1)).astype(jnp.float32)
    bs_f = bs.reshape(-1)[:1].astype(jnp.float32)   # (1,) SMEM scalar

    # Fused single-pass when one batch slab (+ f32 temps) fits the VMEM budget.
    fused_ok = (6 * C * HWp * 4) <= budget
    if fused_ok and not force_streaming:
        Cr = w1.shape[1]
        kernel = _make_fused_kernel(1.0 / HW, use_mxu)
        out = pl.pallas_call(
            kernel,
            out_shape=jax.ShapeDtypeStruct((B, C, HWp), x_nchw.dtype),
            grid_spec=pltpu.PrefetchScalarGridSpec(
                num_scalar_prefetch=0,
                grid=(B,),
                in_specs=[
                    pl.BlockSpec((None, C, HWp), lambda b: (b, 0, 0)),   # x slab
                    pl.BlockSpec((C, Cr), lambda b: (0, 0)),             # w1
                    pl.BlockSpec((1, Cr), lambda b: (0, 0)),             # b1
                    pl.BlockSpec((C, Cr), lambda b: (0, 0)),             # w2^T
                    pl.BlockSpec((C, 1), lambda b: (0, 0)),              # b2 (column)
                    pl.BlockSpec(ws_f.shape, lambda b: (0, 0)),          # ws
                    pl.BlockSpec(memory_space=pltpu.MemorySpace.SMEM),   # bs scalar
                ],
                out_specs=pl.BlockSpec((None, C, HWp), lambda b: (b, 0, 0)),
            ),
            compiler_params=pltpu.CompilerParams(
                dimension_semantics=("parallel",),
                vmem_limit_bytes=vmem_limit,
            ),
        )(x_k,
          w1.astype(jnp.float32),
          b1.reshape(1, Cr).astype(jnp.float32),
          w2.T.astype(jnp.float32),
          b2.reshape(C, 1).astype(jnp.float32),
          ws_f, bs_f)
    else:
        # Streaming two-pass: tiny cSE vector in plain XLA, then one lane-dense
        # gating pass over x tiled along HW (flat parallel grid, megacore-friendly).
        mean = jnp.mean(x.astype(jnp.float32), axis=2)                        # (B, C)
        h = jnp.maximum(mean @ w1.astype(jnp.float32) + b1.astype(jnp.float32), 0.0)
        cse = jax.nn.sigmoid(h @ w2.astype(jnp.float32) + b2.astype(jnp.float32))
        cse = cse[:, :, None].astype(jnp.float32)                             # (B, C, 1)

        T = _pick_hw_tile(HWp, C, B, itemsize, budget)
        num_t = HWp // T
        grid = (B * num_t,)                         # single flat parallel axis

        x_map = lambda i: (i // num_t, 0, i % num_t)
        cse_map = lambda i: (i // num_t, 0, 0)
        res_map = lambda i: (0, 0)

        tile_bytes = C * T * itemsize
        if tile_bytes < 512 * 1024 and num_t >= 8:
            # Tiny tiles + many steps (e.g. small-C on v7x): deepen input buffering.
            x_spec = pl.BlockSpec((None, C, T), x_map, pipeline_mode=pl.Buffered(3))
        else:
            x_spec = pl.BlockSpec((None, C, T), x_map)

        kernel = _make_streaming_kernel(use_mxu)
        out = pl.pallas_call(
            kernel,
            out_shape=jax.ShapeDtypeStruct((B, C, HWp), x_nchw.dtype),
            grid_spec=pltpu.PrefetchScalarGridSpec(
                num_scalar_prefetch=0,
                grid=grid,
                in_specs=[
                    x_spec,                                                # x tile
                    pl.BlockSpec((None, C, 1), cse_map),                   # cse (per batch)
                    pl.BlockSpec(ws_f.shape, res_map),                     # ws (resident)
                    pl.BlockSpec(memory_space=pltpu.MemorySpace.SMEM),     # bs scalar
                ],
                out_specs=pl.BlockSpec((None, C, T), x_map),
            ),
            compiler_params=pltpu.CompilerParams(
                dimension_semantics=("parallel",),
                vmem_limit_bytes=vmem_limit,
            ),
        )(x_k, cse, ws_f, bs_f)

    if HWp != HW:
        out = out[:, :, :HW]
    return out.reshape(B, C, H, W)


# ---------------------------------------------------------------------------
# Reference & params
# ---------------------------------------------------------------------------
def _reference(x_nchw, params):
    """Plain-JAX reference mirroring the PyTorch module exactly (NCHW)."""
    w1, b1, w2, b2, ws, bs = params
    mean = jnp.mean(x_nchw, axis=(2, 3))                          # (B, C)
    h = jnp.maximum(mean @ w1 + b1, 0.0)                          # (B, C//r)
    cse = jax.nn.sigmoid(h @ w2 + b2)                             # (B, C)
    s = jnp.einsum('bchw,c->bhw', x_nchw, ws[:, 0]) + bs[0, 0]    # (B, H, W)
    sse = jax.nn.sigmoid(s)
    return x_nchw * cse[:, :, None, None] + x_nchw * sse[:, None, :, :]


def make_params(key, C, reduction=16):
    """Deterministic init. Conv2d 1x1 weights (out, in, 1, 1) stored as (in, out) matrices."""
    Cr = max(C // reduction, 1)
    k1, k2, k3, k4, k5, k6 = jax.random.split(key, 6)
    w1 = jax.random.normal(k1, (C, Cr), jnp.float32) * 0.1
    b1 = jax.random.normal(k2, (1, Cr), jnp.float32) * 0.1
    w2 = jax.random.normal(k3, (Cr, C), jnp.float32) * 0.1
    b2 = jax.random.normal(k4, (1, C), jnp.float32) * 0.1
    ws = jax.random.normal(k5, (C, 1), jnp.float32) * 0.1
    bs = jax.random.normal(k6, (1, 1), jnp.float32) * 0.1
    return (w1, b1, w2, b2, ws, bs)


if __name__ == "__main__":
    key = jax.random.PRNGKey(0)
    kx, kp, kx2, kp2 = jax.random.split(key, 4)

    # Test 1: small layer (HW multiple of 128) -> fused single-pass path.
    B, C, H, W = 2, 32, 16, 16
    x = jax.random.normal(kx, (B, C, H, W), jnp.float32)
    params = make_params(kp, C, reduction=16)
    out = jax.block_until_ready(scse_attention(x, params))
    ref = _reference(x, params)
    assert out.shape == ref.shape and out.dtype == ref.dtype
    assert jnp.allclose(out, ref, atol=1e-5, rtol=1e-5), "fused path mismatch"

    # Test 2: non-multiple-of-128 spatial size -> exercises HW padding on both
    # the fused path and the (forced) streaming/tiled path.
    B2, C2, H2, W2 = 1, 16, 24, 24
    x2 = jax.random.normal(kx2, (B2, C2, H2, W2), jnp.float32)
    params2 = make_params(kp2, C2, reduction=16)
    ref2 = _reference(x2, params2)
    out2a = jax.block_until_ready(scse_attention(x2, params2))
    out2b = jax.block_until_ready(scse_attention(x2, params2, force_streaming=True))
    assert jnp.allclose(out2a, ref2, atol=1e-5, rtol=1e-5), "fused+pad path mismatch"
    assert jnp.allclose(out2b, ref2, atol=1e-5, rtol=1e-5), "streaming path mismatch"

    print("KERNEL_OK")
</pallas_src>

<mosaic_0001>
module attributes {stable_mosaic.version = 11 : i64} {
  func.func @kernel(%arg0: i32, %arg1: memref<1x32x256xf32, #tpu.memory_space<vmem>>, %arg2: memref<32x2xf32, #tpu.memory_space<vmem>>, %arg3: memref<1x2xf32, #tpu.memory_space<vmem>>, %arg4: memref<32x2xf32, #tpu.memory_space<vmem>>, %arg5: memref<32x1xf32, #tpu.memory_space<vmem>>, %arg6: memref<32x1xf32, #tpu.memory_space<vmem>>, %arg7: memref<1xf32, #tpu.memory_space<smem>>, %arg8: memref<1x32x256xf32, #tpu.memory_space<vmem>>) attributes {dimension_semantics = [#tpu.dimension_semantics<parallel>], iteration_bounds = array<i64: 2>, scalar_prefetch = 0 : i64, scratch_operands = 0 : i64, tpu.core_type = #tpu.core_type<tc>, window_params = [{transform_indices = @transform_0, window_bounds = array<i64: 1, 32, 256>}, {pipeline_mode = #tpu.pipeline_mode<synchronous>, transform_indices = @transform_1, window_bounds = array<i64: 32, 2>}, {pipeline_mode = #tpu.pipeline_mode<synchronous>, transform_indices = @transform_2, window_bounds = array<i64: 1, 2>}, {pipeline_mode = #tpu.pipeline_mode<synchronous>, transform_indices = @transform_3, window_bounds = array<i64: 32, 2>}, {pipeline_mode = #tpu.pipeline_mode<synchronous>, transform_indices = @transform_4, window_bounds = array<i64: 32, 1>}, {pipeline_mode = #tpu.pipeline_mode<synchronous>, transform_indices = @transform_5, window_bounds = array<i64: 32, 1>}, {transform_indices = @transform_6, window_bounds = array<i64: 1>}, {transform_indices = @transform_7, window_bounds = array<i64: 1, 32, 256>}]} {
    %c0 = arith.constant 0 : index
    %c0_0 = arith.constant 0 : index
    %c0_1 = arith.constant 0 : index
    %0 = vector.load %arg1[%c0, %c0_0, %c0_1] : memref<1x32x256xf32, #tpu.memory_space<vmem>>, vector<1x32x256xf32>
    %1 = vector.shape_cast %0 : vector<1x32x256xf32> to vector<32x256xf32>
    %cst = arith.constant dense<0.000000e+00> : vector<32xf32>
    %2 = vector.multi_reduction <add>, %1, %cst [1] : vector<32x256xf32> to vector<32xf32>
    %3 = vector.shape_cast %2 : vector<32xf32> to vector<32x1xf32>
    %cst_2 = arith.constant 3.906250e-03 : f32
    %4 = vector.broadcast %cst_2 : f32 to vector<32x1xf32>
    %5 = arith.mulf %3, %4 : vector<32x1xf32>
    %c0_3 = arith.constant 0 : index
    %c0_4 = arith.constant 0 : index
    %6 = vector.load %arg2[%c0_3, %c0_4] : memref<32x2xf32, #tpu.memory_space<vmem>>, vector<32x2xf32>
    %7 = vector.broadcast %5 : vector<32x1xf32> to vector<32x2xf32>
    %8 = arith.mulf %7, %6 : vector<32x2xf32>
    %cst_5 = arith.constant dense<0.000000e+00> : vector<2xf32>
    %9 = vector.multi_reduction <add>, %8, %cst_5 [0] : vector<32x2xf32> to vector<2xf32>
    %10 = vector.shape_cast %9 : vector<2xf32> to vector<1x2xf32>
    %c0_6 = arith.constant 0 : index
    %c0_7 = arith.constant 0 : index
    %11 = vector.load %arg3[%c0_6, %c0_7] : memref<1x2xf32, #tpu.memory_space<vmem>>, vector<1x2xf32>
    %12 = arith.addf %10, %11 : vector<1x2xf32>
    %cst_8 = arith.constant 0.000000e+00 : f32
    %13 = vector.broadcast %cst_8 : f32 to vector<1x2xf32>
    %14 = arith.maximumf %12, %13 : vector<1x2xf32>
    %c0_9 = arith.constant 0 : index
    %c0_10 = arith.constant 0 : index
    %15 = vector.load %arg4[%c0_9, %c0_10] : memref<32x2xf32, #tpu.memory_space<vmem>>, vector<32x2xf32>
    %16 = vector.broadcast %14 : vector<1x2xf32> to vector<32x2xf32>
    %17 = arith.mulf %15, %16 : vector<32x2xf32>
    %cst_11 = arith.constant dense<0.000000e+00> : vector<32xf32>
    %18 = vector.multi_reduction <add>, %17, %cst_11 [1] : vector<32x2xf32> to vector<32xf32>
    %19 = vector.shape_cast %18 : vector<32xf32> to vector<32x1xf32>
    %c0_12 = arith.constant 0 : index
    %c0_13 = arith.constant 0 : index
    %20 = vector.load %arg5[%c0_12, %c0_13] : memref<32x1xf32, #tpu.memory_space<vmem>>, vector<32x1xf32>
    %21 = arith.addf %19, %20 : vector<32x1xf32>
    %22 = arith.negf %21 : vector<32x1xf32>
    %23 = math.exp %22 : vector<32x1xf32>
    %cst_14 = arith.constant 1.000000e+00 : f32
    %24 = vector.broadcast %cst_14 : f32 to vector<32x1xf32>
    %25 = arith.addf %24, %23 : vector<32x1xf32>
    %26 = arith.divf %24, %25 : vector<32x1xf32>
    %c0_15 = arith.constant 0 : index
    %27 = memref.load %arg7[%c0_15] : memref<1xf32, #tpu.memory_space<smem>>
    %c0_16 = arith.constant 0 : index
    %c0_17 = arith.constant 0 : index
    %28 = vector.load %arg6[%c0_16, %c0_17] : memref<32x1xf32, #tpu.memory_space<vmem>>, vector<32x1xf32>
    %29 = vector.broadcast %28 : vector<32x1xf32> to vector<32x256xf32>
    %30 = arith.mulf %1, %29 : vector<32x256xf32>
    %cst_18 = arith.constant dense<0.000000e+00> : vector<256xf32>
    %31 = vector.multi_reduction <add>, %30, %cst_18 [0] : vector<32x256xf32> to vector<256xf32>
    %32 = vector.shape_cast %31 : vector<256xf32> to vector<1x256xf32>
    %33 = vector.broadcast %27 : f32 to vector<1x256xf32>
    %34 = arith.addf %32, %33 : vector<1x256xf32>
    %35 = arith.negf %34 : vector<1x256xf32>
    %36 = math.exp %35 : vector<1x256xf32>
    %cst_19 = arith.constant 1.000000e+00 : f32
    %37 = vector.broadcast %cst_19 : f32 to vector<1x256xf32>
    %38 = arith.addf %37, %36 : vector<1x256xf32>
    %39 = arith.divf %37, %38 : vector<1x256xf32>
    %40 = vector.broadcast %26 : vector<32x1xf32> to vector<32x256xf32>
    %41 = vector.broadcast %39 : vector<1x256xf32> to vector<32x256xf32>
    %42 = arith.addf %40, %41 : vector<32x256xf32>
    %43 = arith.mulf %1, %42 : vector<32x256xf32>
    %c0_20 = arith.constant 0 : index
    %c0_21 = arith.constant 0 : index
    %c0_22 = arith.constant 0 : index
    %44 = vector.load %arg8[%c0_20, %c0_21, %c0_22] : memref<1x32x256xf32, #tpu.memory_space<vmem>>, vector<1x32x256xf32>
    %45 = vector.shape_cast %44 : vector<1x32x256xf32> to vector<32x256xf32>
    %46 = vector.shape_cast %43 : vector<32x256xf32> to vector<1x32x256xf32>
    tpu.vector_store %arg8[%c0_20, %c0_21, %c0_22], %46 {strides = array<i32>} : memref<1x32x256xf32, #tpu.memory_space<vmem>>, vector<1x32x256xf32>,
    return
  }
  func.func @transform_0(%arg0: i32) -> (i32, i32, i32) {
    %c0_i32 = arith.constant 0 : i32
    %c0_i32_0 = arith.constant 0 : i32
    %c0_i32_1 = arith.constant 0 : i32
    return %arg0, %c0_i32, %c0_i32_0 : i32, i32, i32
  }
  func.func @transform_1(%arg0: i32) -> (i32, i32) {
    %c0_i32 = arith.constant 0 : i32
    %c0_i32_0 = arith.constant 0 : i32
    %c0_i32_1 = arith.constant 0 : i32
    return %c0_i32, %c0_i32_0 : i32, i32
  }
  func.func @transform_2(%arg0: i32) -> (i32, i32) {
    %c0_i32 = arith.constant 0 : i32
    %c0_i32_0 = arith.constant 0 : i32
    %c0_i32_1 = arith.constant 0 : i32
    return %c0_i32, %c0_i32_0 : i32, i32
  }
  func.func @transform_3(%arg0: i32) -> (i32, i32) {
    %c0_i32 = arith.constant 0 : i32
    %c0_i32_0 = arith.constant 0 : i32
    %c0_i32_1 = arith.constant 0 : i32
    return %c0_i32, %c0_i32_0 : i32, i32
  }
  func.func @transform_4(%arg0: i32) -> (i32, i32) {
    %c0_i32 = arith.constant 0 : i32
    %c0_i32_0 = arith.constant 0 : i32
    %c0_i32_1 = arith.constant 0 : i32
    return %c0_i32, %c0_i32_0 : i32, i32
  }
  func.func @transform_5(%arg0: i32) -> (i32, i32) {
    %c0_i32 = arith.constant 0 : i32
    %c0_i32_0 = arith.constant 0 : i32
    %c0_i32_1 = arith.constant 0 : i32
    return %c0_i32, %c0_i32_0 : i32, i32
  }
  func.func @transform_6(%arg0: i32) -> i32 {
    %c0_i32 = arith.constant 0 : i32
    %c0_i32_0 = arith.constant 0 : i32
    return %c0_i32 : i32
  }
  func.func @transform_7(%arg0: i32) -> (i32, i32, i32) {
    %c0_i32 = arith.constant 0 : i32
    %c0_i32_0 = arith.constant 0 : i32
    %c0_i32_1 = arith.constant 0 : i32
    return %arg0, %c0_i32, %c0_i32_0 : i32, i32, i32
  }
}

</mosaic_0001>

<llo_original>
// kernel: tpu_custom_call.1
$region0: #{tpu_custom_call.1}
  #allocation0 [shape = 'u32[]', space=smem, size = 0x4, offset = 0x4, fixed_abs, tag = 'smem constant byte address 0x4 - core index']
  #allocation1 [shape = 'u32[72,128]{1,0:T(1,128)}', space=vmem, size = 0x9000, scoped, tag = 'internal scratch']
  #allocation2 [shape = 'f32[1]{0:T(128)S(6)}', space=smem, size = 0x200, scoped, tag = 'scoped memory for tpu_custom_call.1']
  %s0 = inlined_call_operand.hbm [shape: f32[2,32,256], index: 0, kind: input, shape index: {}]
  %s1 = inlined_call_operand.vmem [shape: f32[32,2], index: 1, kind: input, shape index: {}]
  %s2 = inlined_call_operand.vmem [shape: f32[1,2], index: 2, kind: input, shape index: {}]
  %s3 = inlined_call_operand.vmem [shape: f32[32,2], index: 3, kind: input, shape index: {}]
  %s4 = inlined_call_operand.vmem [shape: f32[32,1], index: 4, kind: input, shape index: {}]
  %s5 = inlined_call_operand.vmem [shape: f32[32,1], index: 5, kind: input, shape index: {}]
  %s6 = inlined_call_operand.<no memory space> [shape: f32[1], index: 6, kind: input, shape index: {}]
  %s7 = inlined_call_operand.hbm [shape: f32[2,32,256], index: 7, kind: output, shape index: {}]
  %s8 = sld [smem:[#allocation0]]
  $region65: #{tpu_custom_call.1} parent=0
    _
  %s10 = ssub.s32 1, %s8
  %s11 = scalar_select 0, %s10, %s8
  %12 = sst [smem:[#allocation2]] %s6
  $region1: #{tpu_custom_call.1} parent=0
    #allocation3 [shape = 'u8[65536]{0}', space=vmem, size = 0x10000, scoped, tag = 'input window, operand 0']
    #allocation4 [shape = 's32[2]{0}', space=sflag, size = 0x8, scoped, tag = 'scoped memory for tpu_custom_call.1']
    #allocation5 [shape = 's32[2]{0}', space=sflag, size = 0x8, scoped, tag = 'scoped memory for tpu_custom_call.1']
    #allocation6 [shape = 'u8[65536]{0}', space=vmem, size = 0x10000, scoped, tag = 'output window, operand 0']
    %13 = vsyncpa [#allocation4], 0
    %s14 = scalar_lea.sflag [#allocation4], 1
    %15 = vsyncpa %s14, 0
    %16 = vsyncpa [#allocation5], 0
    %s17 = scalar_lea.sflag [#allocation5], 1
    %18 = vsyncpa %s17, 0
    loop: start=0, step=1, limit=4
    $region2: #{tpu_custom_call.1} parent=1 // loop_pre_header
      _
    $region3: #{tpu_custom_call.1} parent=1 // loop_header
      %s20 = sphi 0, %s24
      %p21 = scmp.ge.s32.totalorder %s20, 4
      %s30 = sphi 0, %s32
      %s33 = sphi 0, %s30
      %s34 = sphi 0, %s33
      %s50 = sphi 0, %s34
      %s54 = sphi 0, %s54
      %s56 = sphi 0, %s54
      %s57 = sphi 0, %s56
      %s71 = sphi 0, %s57
      %s75 = sphi 0, %s75
      %s77 = sphi 0, %s75
      %s78 = sphi 0, %s77
      %s92 = sphi 0, %s78
      %s96 = sphi 0, %s96
      %s98 = sphi 0, %s96
      %s99 = sphi 0, %s98
      %s113 = sphi 0, %s99
      %s117 = sphi 0, %s117
      %s119 = sphi 0, %s117
      %s120 = sphi 0, %s119
      %s134 = sphi 0, %s120
      %s138 = sphi 0, %s138
      %s140 = sphi 0, %s138
      %s141 = sphi 0, %s140
      %s155 = sphi 0, %s141
      %s159 = sphi 0, %s159
      %s161 = sphi 0, %s159
      %s162 = sphi 0, %s161
      %s176 = sphi 0, %s162
      %s182 = sphi 0, %s184
      %s185 = sphi 0, %s182
      %s186 = sphi 0, %s185
      %s202 = sphi 0, %s186
    $region4: #{tpu_custom_call.1} parent=1 // loop_header_branch
      %23 = sbr.rel (%p21) target = $region8
    $region5: #{tpu_custom_call.1} parent=1 // loop_body
      %s25 = ssub.s32 %s20, 1
      %s26 = ssub.s32 %s20, 2
      %s27 = sadd.s32 %s20, 1
      %s28 = ssub.s32 %s20, %s27
      %p29 = scmp.eq.s32.totalorder %s28, 0
      %s31 = sadd.s32 %s30, 1
      %s32 = scalar_select %p29, %s30, %s31
      %p35 = pneg %p29
      %p36 = scmp.eq.s32.totalorder %s20, 1
      %p37 = por %p35, %p36
      %p38 = scmp.ne.s32.totalorder %s30, %s33
      %p39 = scmp.eq.s32.totalorder %s20, 0
      %p40 = por %p38, %p39
      %p41 = scmp.ne.s32.totalorder %s30, %s33
      %p42 = scmp.eq.s32.totalorder %s25, 1
      %p43 = por %p41, %p42
      %p44 = scmp.ne.s32.totalorder %s33, %s34
      %p45 = scmp.eq.s32.totalorder %s25, 0
      %p46 = por %p44, %p45
      %p47 = scmp.ne.s32.totalorder %s33, %s34
      %p48 = scmp.eq.s32.totalorder %s26, 1
      %p49 = por %p47, %p48
      %p51 = scmp.ne.s32.totalorder %s34, %s50
      %p52 = scmp.eq.s32.totalorder %s26, 0
      %p53 = por %p51, %p52
      %s55 = sadd.s32 %s54, 1
      %p58 = scmp.eq.s32.totalorder %s20, 1
      %p59 = scmp.ne.s32.totalorder %s54, %s56
      %p60 = scmp.eq.s32.totalorder %s20, 0
      %p61 = por %p59, %p60
      %p62 = scmp.ne.s32.totalorder %s54, %s56
      %p63 = scmp.eq.s32.totalorder %s25, 1
      %p64 = por %p62, %p63
      %p65 = scmp.ne.s32.totalorder %s56, %s57
      %p66 = scmp.eq.s32.totalorder %s25, 0
      %p67 = por %p65, %p66
      %p68 = scmp.ne.s32.totalorder %s56, %s57
      %p69 = scmp.eq.s32.totalorder %s26, 1
      %p70 = por %p68, %p69
      %p72 = scmp.ne.s32.totalorder %s57, %s71
      %p73 = scmp.eq.s32.totalorder %s26, 0
      %p74 = por %p72, %p73
      %s76 = sadd.s32 %s75, 1
      %p79 = scmp.eq.s32.totalorder %s20, 1
      %p80 = scmp.ne.s32.totalorder %s75, %s77
      %p81 = scmp.eq.s32.totalorder %s20, 0
      %p82 = por %p80, %p81
      %p83 = scmp.ne.s32.totalorder %s75, %s77
      %p84 = scmp.eq.s32.totalorder %s25, 1
      %p85 = por %p83, %p84
      %p86 = scmp.ne.s32.totalorder %s77, %s78
      %p87 = scmp.eq.s32.totalorder %s25, 0
      %p88 = por %p86, %p87
      %p89 = scmp.ne.s32.totalorder %s77, %s78
      %p90 = scmp.eq.s32.totalorder %s26, 1
      %p91 = por %p89, %p90
      %p93 = scmp.ne.s32.totalorder %s78, %s92
      %p94 = scmp.eq.s32.totalorder %s26, 0
      %p95 = por %p93, %p94
      %s97 = sadd.s32 %s96, 1
      %p100 = scmp.eq.s32.totalorder %s20, 1
      %p101 = scmp.ne.s32.totalorder %s96, %s98
      %p102 = scmp.eq.s32.totalorder %s20, 0
      %p103 = por %p101, %p102
      %p104 = scmp.ne.s32.totalorder %s96, %s98
      %p105 = scmp.eq.s32.totalorder %s25, 1
      %p106 = por %p104, %p105
      %p107 = scmp.ne.s32.totalorder %s98, %s99
      %p108 = scmp.eq.s32.totalorder %s25, 0
      %p109 = por %p107, %p108
      %p110 = scmp.ne.s32.totalorder %s98, %s99
      %p111 = scmp.eq.s32.totalorder %s26, 1
      %p112 = por %p110, %p111
      %p114 = scmp.ne.s32.totalorder %s99, %s113
      %p115 = scmp.eq.s32.totalorder %s26, 0
      %p116 = por %p114, %p115
      %s118 = sadd.s32 %s117, 1
      %p121 = scmp.eq.s32.totalorder %s20, 1
      %p122 = scmp.ne.s32.totalorder %s117, %s119
      %p123 = scmp.eq.s32.totalorder %s20, 0
      %p124 = por %p122, %p123
      %p125 = scmp.ne.s32.totalorder %s117, %s119
      %p126 = scmp.eq.s32.totalorder %s25, 1
      %p127 = por %p125, %p126
      %p128 = scmp.ne.s32.totalorder %s119, %s120
      %p129 = scmp.eq.s32.totalorder %s25, 0
      %p130 = por %p128, %p129
      %p131 = scmp.ne.s32.totalorder %s119, %s120
      %p132 = scmp.eq.s32.totalorder %s26, 1
      %p133 = por %p131, %p132
      %p135 = scmp.ne.s32.totalorder %s120, %s134
      %p136 = scmp.eq.s32.totalorder %s26, 0
      %p137 = por %p135, %p136
      %s139 = sadd.s32 %s138, 1
      %p142 = scmp.eq.s32.totalorder %s20, 1
      %p143 = scmp.ne.s32.totalorder %s138, %s140
      %p144 = scmp.eq.s32.totalorder %s20, 0
      %p145 = por %p143, %p144
      %p146 = scmp.ne.s32.totalorder %s138, %s140
      %p147 = scmp.eq.s32.totalorder %s25, 1
      %p148 = por %p146, %p147
      %p149 = scmp.ne.s32.totalorder %s140, %s141
      %p150 = scmp.eq.s32.totalorder %s25, 0
      %p151 = por %p149, %p150
      %p152 = scmp.ne.s32.totalorder %s140, %s141
      %p153 = scmp.eq.s32.totalorder %s26, 1
      %p154 = por %p152, %p153
      %p156 = scmp.ne.s32.totalorder %s141, %s155
      %p157 = scmp.eq.s32.totalorder %s26, 0
      %p158 = por %p156, %p157
      %s160 = sadd.s32 %s159, 1
      %p163 = scmp.eq.s32.totalorder %s20, 1
      %p164 = scmp.ne.s32.totalorder %s159, %s161
      %p165 = scmp.eq.s32.totalorder %s20, 0
      %p166 = por %p164, %p165
      %p167 = scmp.ne.s32.totalorder %s159, %s161
      %p168 = scmp.eq.s32.totalorder %s25, 1
      %p169 = por %p167, %p168
      %p170 = scmp.ne.s32.totalorder %s161, %s162
      %p171 = scmp.eq.s32.totalorder %s25, 0
      %p172 = por %p170, %p171
      %p173 = scmp.ne.s32.totalorder %s161, %s162
      %p174 = scmp.eq.s32.totalorder %s26, 1
      %p175 = por %p173, %p174
      %p177 = scmp.ne.s32.totalorder %s162, %s176
      %p178 = scmp.eq.s32.totalorder %s26, 0
      %p179 = por %p177, %p178
      %s180 = ssub.s32 %s20, %s27
      %p181 = scmp.eq.s32.totalorder %s180, 0
      %s183 = sadd.s32 %s182, 1
      %s184 = scalar_select %p181, %s182, %s183
      %p187 = pneg %p181
      %p188 = scmp.eq.s32.totalorder %s20, 1
      %p189 = por %p187, %p188
      %p190 = scmp.ne.s32.totalorder %s182, %s185
      %p191 = scmp.eq.s32.totalorder %s20, 0
      %p192 = por %p190, %p191
      %p193 = scmp.ne.s32.totalorder %s182, %s185
      %p194 = scmp.eq.s32.totalorder %s25, 1
      %p195 = por %p193, %p194
      %p196 = scmp.ne.s32.totalorder %s185, %s186
      %p197 = scmp.eq.s32.totalorder %s25, 0
      %p198 = por %p196, %p197
      %p199 = scmp.ne.s32.totalorder %s185, %s186
      %p200 = scmp.eq.s32.totalorder %s26, 1
      %p201 = por %p199, %p200
      %p203 = scmp.ne.s32.totalorder %s186, %s202
      %p204 = scmp.eq.s32.totalorder %s26, 0
      %p205 = por %p203, %p204
      %p206 = scmp.le.s32.totalorder 1, %s20
      %p207 = scmp.lt.s32.totalorder %s20, 3
      %p208 = pnand %p206, %p207
      %p209 = pneg %p208
      // Predicated region
      $region9: #{tpu_custom_call.1} parent=5 // pred_check
        _
      $region10: #{tpu_custom_call.1} parent=5 // pred_check_branch
        %211 = sbr.rel (%p208) target = $region12
      $region11: #{tpu_custom_call.1} parent=5 // pred_region
        %s212 = ssub.s32 %s20, 1
        // Predicated region
        $region13: #{tpu_custom_call.1} parent=11 // pred_check
          %p213 = pneg %p67
        $region14: #{tpu_custom_call.1} parent=11 // pred_check_branch
          %215 = sbr.rel (%p213) target = $region16
        $region15: #{tpu_custom_call.1} parent=11 // pred_region
          _
        $region16: #{tpu_custom_call.1} parent=11 // pred_fallthru
          _
        // Predicated region
        $region17: #{tpu_custom_call.1} parent=11 // pred_check
          %p216 = pneg %p88
        $region18: #{tpu_custom_call.1} parent=11 // pred_check_branch
          %218 = sbr.rel (%p216) target = $region20
        $region19: #{tpu_custom_call.1} parent=11 // pred_region
          _
        $region20: #{tpu_custom_call.1} parent=11 // pred_fallthru
          _
        // Predicated region
        $region21: #{tpu_custom_call.1} parent=11 // pred_check
          %p219 = pneg %p109
        $region22: #{tpu_custom_call.1} parent=11 // pred_check_branch
          %221 = sbr.rel (%p219) target = $region24
        $region23: #{tpu_custom_call.1} parent=11 // pred_region
          _
        $region24: #{tpu_custom_call.1} parent=11 // pred_fallthru
          _
        // Predicated region
        $region25: #{tpu_custom_call.1} parent=11 // pred_check
          %p222 = pneg %p130
        $region26: #{tpu_custom_call.1} parent=11 // pred_check_branch
          %224 = sbr.rel (%p222) target = $region28
        $region27: #{tpu_custom_call.1} parent=11 // pred_region
          _
        $region28: #{tpu_custom_call.1} parent=11 // pred_fallthru
          _
        // Predicated region
        $region29: #{tpu_custom_call.1} parent=11 // pred_check
          %p225 = pneg %p151
        $region30: #{tpu_custom_call.1} parent=11 // pred_check_branch
          %227 = sbr.rel (%p225) target = $region32
        $region31: #{tpu_custom_call.1} parent=11 // pred_region
          _
        $region32: #{tpu_custom_call.1} parent=11 // pred_fallthru
          _
        // Predicated region
        $region33: #{tpu_custom_call.1} parent=11 // pred_check
          %p228 = pneg %p172
        $region34: #{tpu_custom_call.1} parent=11 // pred_check_branch
          %230 = sbr.rel (%p228) target = $region36
        $region35: #{tpu_custom_call.1} parent=11 // pred_region
          _
        $region36: #{tpu_custom_call.1} parent=11 // pred_fallthru
          _
      $region12: #{tpu_custom_call.1} parent=5 // pred_fallthru
        _
      %p231 = scmp.lt.s32.totalorder %s20, 2
      // Predicated region
      $region37: #{tpu_custom_call.1} parent=5 // pred_check
        %p232 = pneg %p231
      $region38: #{tpu_custom_call.1} parent=5 // pred_check_branch
        %234 = sbr.rel (%p232) target = $region40
      $region39: #{tpu_custom_call.1} parent=5 // pred_region
        // Predicated region
        $region41: #{tpu_custom_call.1} parent=39 // pred_check
          %p235 = pneg %p40
        $region42: #{tpu_custom_call.1} parent=39 // pred_check_branch
          %237 = sbr.rel (%p235) target = $region44
        $region43: #{tpu_custom_call.1} parent=39 // pred_region
          %s238 = sand.u32 %s30, 1
          %s239 = scalar_lea.sflag [#allocation4], %s238
          %s240 = sand.u32 %s30, 1
          %s241 = smul.addr %s240, 64
          %s242 = scalar_lea.vmem [#allocation3], %s241
          %244 = vsyncadd %s239, 0
          %s245 = smul.addr %s20, 8
          %s246 = smul.addr %s245, 8
          %s247 = scalar_lea.hbm %s0, %s246
          %s248 = sshll.u32 %s247, 4
          %s249 = int_to_ptr.hbm [resolvable:$true] %s248
          %s250 = sshll.u32 %s242, 4
          %s251 = int_to_ptr.vmem [resolvable:$true] %s250
          %256 = dma.hbm_to_vmem [thread:$0]  %s249, 1024, %s251, %s239, 256, 256, 16
        $region44: #{tpu_custom_call.1} parent=39 // pred_fallthru
          _
      $region40: #{tpu_custom_call.1} parent=5 // pred_fallthru
        _
      %p257 = scmp.le.s32.totalorder 1, %s20
      %p258 = scmp.lt.s32.totalorder %s20, 3
      %p259 = pnand %p257, %p258
      %p260 = pneg %p259
      // Predicated region
      $region45: #{tpu_custom_call.1} parent=5 // pred_check
        _
      $region46: #{tpu_custom_call.1} parent=5 // pred_check_branch
        %262 = sbr.rel (%p259) target = $region48
      $region47: #{tpu_custom_call.1} parent=5 // pred_region
        %s263 = ssub.s32 %s20, 1
        %s264 = sand.u32 %s33, 1
        %s265 = scalar_lea.sflag [#allocation4], %s264
        %s266 = sand.u32 %s33, 1
        %s267 = smul.addr %s266, 64
        %s268 = scalar_lea.vmem [#allocation3], %s267
        // Predicated region
        $region49: #{tpu_custom_call.1} parent=47 // pred_check
          %p269 = pneg %p46
        $region50: #{tpu_custom_call.1} parent=47 // pred_check_branch
          %271 = sbr.rel (%p269) target = $region52
        $region51: #{tpu_custom_call.1} parent=47 // pred_region
          %273 = dma.done %s265, 1024
        $region52: #{tpu_custom_call.1} parent=47 // pred_fallthru
          _
        %s274 = sand.u32 %s33, 1
        %s275 = scalar_lea.sflag [#allocation4], %s274
        %s276 = sand.u32 %s33, 1
        %s277 = smul.addr %s276, 64
        %s278 = scalar_lea.vmem [#allocation3], %s277
        %p279 = pneg %p46
        %p280 = pneg %p43
        %p281 = pneg %p67
        %p282 = pneg %p64
        %p283 = pneg %p88
        %p284 = pneg %p85
        %p285 = pneg %p109
        %p286 = pneg %p106
        %p287 = pneg %p130
        %p288 = pneg %p127
        %p289 = pneg %p151
        %p290 = pneg %p148
        %p291 = pneg %p172
        %p292 = pneg %p169
        %p293 = pneg %p198
        %p294 = pneg %p195
        %s295 = sand.u32 %s185, 1
        %s296 = scalar_lea.sflag [#allocation5], %s295
        %s297 = sand.u32 %s185, 1
        %s298 = smul.addr %s297, 64
        %s299 = scalar_lea.vmem [#allocation6], %s298
        %v300 = vld [vmem:[%s268] sm:$0xff]
        %v301 = vld [vmem:[%s268 + $0x8] sm:$0xff]
        %v302 = vld [vmem:[%s268 + $0x10] sm:$0xff]
        %v303 = vld [vmem:[%s268 + $0x18] sm:$0xff]
        %v304 = vld [vmem:[%s268 + $0x20] sm:$0xff]
        %v305 = vld [vmem:[%s268 + $0x28] sm:$0xff]
        %v306 = vld [vmem:[%s268 + $0x30] sm:$0xff]
        %v307 = vld [vmem:[%s268 + $0x38] sm:$0xff]
        %v308 = vadd.f32 %v300, %v301
        %309 = vadd.xlane.f32.xlu0 %v308
        %v310 = vpop.xlane.xlu0 %309
        %v311 = vadd.f32 %v302, %v303
        %312 = vadd.xlane.f32.xlu0 %v311
        %v313 = vpop.xlane.xlu0 %312
        %v314 = vadd.f32 %v304, %v305
        %315 = vadd.xlane.f32.xlu0 %v314
        %v316 = vpop.xlane.xlu0 %315
        %v317 = vadd.f32 %v306, %v307
        %318 = vadd.xlane.f32.xlu0 %v317
        %v319 = vpop.xlane.xlu0 %318
        %v320 = vmul.f32 %v310, 0.00390625
        %v321 = vmul.f32 %v313, 0.00390625
        %v322 = vmul.f32 %v316, 0.00390625
        %v323 = vmul.f32 %v319, 0.00390625
        %v324 = vld [vmem:[%s1] sm:$0xff]
        %v325 = vld [vmem:[%s1 + $0x8] sm:$0xff]
        %v326 = vld [vmem:[%s1 + $0x10] sm:$0xff]
        %v327 = vld [vmem:[%s1 + $0x18] sm:$0xff]
        %v328 = vmul.f32 %v320, %v324
        %v329 = vmul.f32 %v321, %v325
        %v330 = vmul.f32 %v322, %v326
        %v331 = vmul.f32 %v323, %v327
        %vm332 = vcmask 15360
        %v333 = vsel %vm332, %v328, 0.0
        %v334 = vsel %vm332, %v329, 0.0
        %v335 = vadd.f32 %v333, %v334
        %v336 = vsel %vm332, %v330, 0.0
        %v337 = vadd.f32 %v335, %v336
        %v338 = vsel %vm332, %v331, 0.0
        %v339 = vadd.f32 %v337, %v338
        %v340 = vrot.slane %v339, 4
        %v341 = vadd.f32 %v339, %v340
        %v342 = vrot.slane %v341, 2
        %v343 = vadd.f32 %v341, %v342
        %v344 = vrot.slane %v343, 1
        %v345 = vadd.f32 %v343, %v344
        %v346 = vld [vmem:[%s2] sm:$0x1]
        %v347 = vadd.f32 %v345, %v346
        %v348 = vmax.f32 %v347, 0.0
        %v349 = vld [vmem:[%s3] sm:$0xff]
        %v350 = vld [vmem:[%s3 + $0x8] sm:$0xff]
        %v351 = vld [vmem:[%s3 + $0x10] sm:$0xff]
        %v352 = vld [vmem:[%s3 + $0x18] sm:$0xff]
        %v353 = vperm.slane %v348, 0
        %v354 = vmul.f32 %v349, %v353
        %v355 = vmul.f32 %v350, %v353
        %v356 = vmul.f32 %v351, %v353
        %v357 = vmul.f32 %v352, %v353
        %v358 = vsel %vm332, %v354, 0.0
        %359 = vadd.xlane.f32.xlu0 %v358
        %v360 = vpop.xlane.xlu0 %359
        %v361 = vsel %vm332, %v355, 0.0
        %362 = vadd.xlane.f32.xlu0 %v361
        %v363 = vpop.xlane.xlu0 %362
        %v364 = vsel %vm332, %v356, 0.0
        %365 = vadd.xlane.f32.xlu0 %v364
        %v366 = vpop.xlane.xlu0 %365
        %v367 = vsel %vm332, %v357, 0.0
        %368 = vadd.xlane.f32.xlu0 %v367
        %v369 = vpop.xlane.xlu0 %368
        %v370 = vld [vmem:[%s4] sm:$0xff]
        %v371 = vld [vmem:[%s4 + $0x8] sm:$0xff]
        %v372 = vld [vmem:[%s4 + $0x10] sm:$0xff]
        %v373 = vld [vmem:[%s4 + $0x18] sm:$0xff]
        %v374 = vadd.f32 %v360, %v370
        %v375 = vadd.f32 %v363, %v371
        %v376 = vadd.f32 %v366, %v372
        %v377 = vadd.f32 %v369, %v373
        %v378 = vxor.u32 %v374, 2147483648
        %v379 = vxor.u32 %v375, 2147483648
        %v380 = vxor.u32 %v376, 2147483648
        %v381 = vxor.u32 %v377, 2147483648
        %v382 = vmul.f32 %v378, 1.442695
        %v383 = vpow.pop %v382
        %v384 = vmul.f32 %v379, 1.442695
        %v385 = vpow.pop %v384
        %v386 = vmul.f32 %v380, 1.442695
        %v387 = vpow.pop %v386
        %v388 = vmul.f32 %v381, 1.442695
        %v389 = vpow.pop %v388
        %v390 = vadd.f32 %v383, 1.0
        %v391 = vadd.f32 %v385, 1.0
        %v392 = vadd.f32 %v387, 1.0
        %v393 = vadd.f32 %v389, 1.0
        %v394 = vrcp.pop %v390
        %v395 = vmul.f32 %v390, %v394
        %v396 = vsub.f32 1.0, %v395
        %v397 = vmul.f32 %v394, %v396
        %v398 = vadd.f32 %v394, %v397
        %vm399 = vweird.f32 %v390
        %vm400 = vweird.f32 %v394
        %vm401 = vmor %vm399, %vm400
        %v402 = vsel %vm401, %v394, %v398
        %v403 = vand.u32 2147483647, %v390
        %vm404 = vcmp.eq.f32.partialorder %v403, 8.507059e+37
        %v405 = vand.u32 %v390, 2147483648
        %v406 = vor.u32 1.1754944e-38, %v405
        %v407 = vsel %vm404, %v406, %v402
        %v408 = vmul.f32 1.0, %v407
        %v409 = vrcp.pop %v391
        %v410 = vmul.f32 %v391, %v409
        %v411 = vsub.f32 1.0, %v410
        %v412 = vmul.f32 %v409, %v411
        %v413 = vadd.f32 %v409, %v412
        %vm414 = vweird.f32 %v391
        %vm415 = vweird.f32 %v409
        %vm416 = vmor %vm414, %vm415
        %v417 = vsel %vm416, %v409, %v413
        %v418 = vand.u32 2147483647, %v391
        %vm419 = vcmp.eq.f32.partialorder %v418, 8.507059e+37
        %v420 = vand.u32 %v391, 2147483648
        %v421 = vor.u32 1.1754944e-38, %v420
        %v422 = vsel %vm419, %v421, %v417
        %v423 = vmul.f32 1.0, %v422
        %v424 = vrcp.pop %v392
        %v425 = vmul.f32 %v392, %v424
        %v426 = vsub.f32 1.0, %v425
        %v427 = vmul.f32 %v424, %v426
        %v428 = vadd.f32 %v424, %v427
        %vm429 = vweird.f32 %v392
        %vm430 = vweird.f32 %v424
        %vm431 = vmor %vm429, %vm430
        %v432 = vsel %vm431, %v424, %v428
        %v433 = vand.u32 2147483647, %v392
        %vm434 = vcmp.eq.f32.partialorder %v433, 8.507059e+37
        %v435 = vand.u32 %v392, 2147483648
        %v436 = vor.u32 1.1754944e-38, %v435
        %v437 = vsel %vm434, %v436, %v432
        %v438 = vmul.f32 1.0, %v437
        %v439 = vrcp.pop %v393
        %v440 = vmul.f32 %v393, %v439
        %v441 = vsub.f32 1.0, %v440
        %v442 = vmul.f32 %v439, %v441
        %v443 = vadd.f32 %v439, %v442
        %vm444 = vweird.f32 %v393
        %vm445 = vweird.f32 %v439
        %vm446 = vmor %vm444, %vm445
        %v447 = vsel %vm446, %v439, %v443
        %v448 = vand.u32 2147483647, %v393
        %vm449 = vcmp.eq.f32.partialorder %v448, 8.507059e+37
        %v450 = vand.u32 %v393, 2147483648
        %v451 = vor.u32 1.1754944e-38, %v450
        %v452 = vsel %vm449, %v451, %v447
        %v453 = vmul.f32 1.0, %v452
        %s454 = sld [smem:[#allocation2]]
        %v455 = vld [vmem:[%s5] sm:$0xff]
        %v456 = vld [vmem:[%s5 + $0x8] sm:$0xff]
        %v457 = vld [vmem:[%s5 + $0x10] sm:$0xff]
        %v458 = vld [vmem:[%s5 + $0x18] sm:$0xff]
        %460 = vset.pattern.permute.xlu0 0
        %461 = vperm.xlu0 %460, %v455
        %v462 = vpop.permute.xlu0 %461
        %465 = vset.pattern.permute.xlu0 0
        %466 = vperm.xlu0 %465, %v456
        %v467 = vpop.permute.xlu0 %466
        %470 = vset.pattern.permute.xlu0 0
        %471 = vperm.xlu0 %470, %v457
        %v472 = vpop.permute.xlu0 %471
        %475 = vset.pattern.permute.xlu0 0
        %476 = vperm.xlu0 %475, %v458
        %v477 = vpop.permute.xlu0 %476
        %v479 = vmul.f32 %v300, %v462
        %v480 = vmul.f32 %v301, %v462
        %v481 = vmul.f32 %v302, %v467
        %v482 = vmul.f32 %v303, %v467
        %v483 = vmul.f32 %v304, %v472
        %v484 = vmul.f32 %v305, %v472
        %v485 = vmul.f32 %v306, %v477
        %v486 = vmul.f32 %v307, %v477
        %v487 = vadd.f32 %v479, %v481
        %v488 = vadd.f32 %v487, %v483
        %v489 = vadd.f32 %v488, %v485
        %v490 = vrot.slane %v489, 4
        %v491 = vadd.f32 %v489, %v490
        %v492 = vrot.slane %v491, 2
        %v493 = vadd.f32 %v491, %v492
        %v494 = vrot.slane %v493, 1
        %v495 = vadd.f32 %v493, %v494
        %v496 = vadd.f32 %v480, %v482
        %v497 = vadd.f32 %v496, %v484
        %v498 = vadd.f32 %v497, %v486
        %v499 = vrot.slane %v498, 4
        %v500 = vadd.f32 %v498, %v499
        %v501 = vrot.slane %v500, 2
        %v502 = vadd.f32 %v500, %v501
        %v503 = vrot.slane %v502, 1
        %v504 = vadd.f32 %v502, %v503
        %v505 = vstv %s454
        %v506 = vadd.f32 %v495, %v505
        %v507 = vadd.f32 %v504, %v505
        %v508 = vxor.u32 %v506, 2147483648
        %v509 = vxor.u32 %v507, 2147483648
        %v510 = vmul.f32 %v508, 1.442695
        %v511 = vpow.pop %v510
        %v512 = vmul.f32 %v509, 1.442695
        %v513 = vpow.pop %v512
        %v514 = vadd.f32 %v511, 1.0
        %v515 = vadd.f32 %v513, 1.0
        %v516 = vrcp.pop %v514
        %v517 = vmul.f32 %v514, %v516
        %v518 = vsub.f32 1.0, %v517
        %v519 = vmul.f32 %v516, %v518
        %v520 = vadd.f32 %v516, %v519
        %vm521 = vweird.f32 %v514
        %vm522 = vweird.f32 %v516
        %vm523 = vmor %vm521, %vm522
        %v524 = vsel %vm523, %v516, %v520
        %v525 = vand.u32 2147483647, %v514
        %vm526 = vcmp.eq.f32.partialorder %v525, 8.507059e+37
        %v527 = vand.u32 %v514, 2147483648
        %v528 = vor.u32 1.1754944e-38, %v527
        %v529 = vsel %vm526, %v528, %v524
        %v530 = vmul.f32 1.0, %v529
        %v531 = vrcp.pop %v515
        %v532 = vmul.f32 %v515, %v531
        %v533 = vsub.f32 1.0, %v532
        %v534 = vmul.f32 %v531, %v533
        %v535 = vadd.f32 %v531, %v534
        %vm536 = vweird.f32 %v515
        %vm537 = vweird.f32 %v531
        %vm538 = vmor %vm536, %vm537
        %v539 = vsel %vm538, %v531, %v535
        %v540 = vand.u32 2147483647, %v515
        %vm541 = vcmp.eq.f32.partialorder %v540, 8.507059e+37
        %v542 = vand.u32 %v515, 2147483648
        %v543 = vor.u32 1.1754944e-38, %v542
        %v544 = vsel %vm541, %v543, %v539
        %v545 = vmul.f32 1.0, %v544
        %547 = vset.pattern.permute.xlu0 0
        %548 = vperm.xlu0 %547, %v408
        %v549 = vpop.permute.xlu0 %548
        %552 = vset.pattern.permute.xlu0 0
        %553 = vperm.xlu0 %552, %v423
        %v554 = vpop.permute.xlu0 %553
        %557 = vset.pattern.permute.xlu0 0
        %558 = vperm.xlu0 %557, %v438
        %v559 = vpop.permute.xlu0 %558
        %562 = vset.pattern.permute.xlu0 0
        %563 = vperm.xlu0 %562, %v453
        %v564 = vpop.permute.xlu0 %563
        %v566 = vadd.f32 %v549, %v530
        %v567 = vadd.f32 %v549, %v545
        %v568 = vadd.f32 %v554, %v530
        %v569 = vadd.f32 %v554, %v545
        %v570 = vadd.f32 %v559, %v530
        %v571 = vadd.f32 %v559, %v545
        %v572 = vadd.f32 %v564, %v530
        %v573 = vadd.f32 %v564, %v545
        %v574 = vmul.f32 %v300, %v566
        %v575 = vmul.f32 %v301, %v567
        %v576 = vmul.f32 %v302, %v568
        %v577 = vmul.f32 %v303, %v569
        %v578 = vmul.f32 %v304, %v570
        %v579 = vmul.f32 %v305, %v571
        %v580 = vmul.f32 %v306, %v572
        %v581 = vmul.f32 %v307, %v573
        %582 = vst [vmem:[%s299] sm:$0xff] %v574
        %583 = vst [vmem:[%s299 + $0x8] sm:$0xff] %v575
        %584 = vst [vmem:[%s299 + $0x10] sm:$0xff] %v576
        %585 = vst [vmem:[%s299 + $0x18] sm:$0xff] %v577
        %586 = vst [vmem:[%s299 + $0x20] sm:$0xff] %v578
        %587 = vst [vmem:[%s299 + $0x28] sm:$0xff] %v579
        %588 = vst [vmem:[%s299 + $0x30] sm:$0xff] %v580
        %589 = vst [vmem:[%s299 + $0x38] sm:$0xff] %v581
        %s590 = sand.u32 %s185, 1
        %s591 = scalar_lea.sflag [#allocation5], %s590
        %s592 = sand.u32 %s185, 1
        %s593 = smul.addr %s592, 64
        %s594 = scalar_lea.vmem [#allocation6], %s593
        // Predicated region
        $region53: #{tpu_custom_call.1} parent=47 // pred_check
          %p595 = pneg %p195
        $region54: #{tpu_custom_call.1} parent=47 // pred_check_branch
          %597 = sbr.rel (%p595) target = $region56
        $region55: #{tpu_custom_call.1} parent=47 // pred_region
          %599 = vsyncadd %s591, 0
          %s600 = smul.addr %s25, 8
          %s601 = smul.addr %s600, 8
          %s602 = scalar_lea.hbm %s7, %s601
          %s603 = sshll.u32 %s594, 4
          %s604 = int_to_ptr.vmem [resolvable:$true] %s603
          %s605 = sshll.u32 %s602, 4
          %s606 = int_to_ptr.hbm [resolvable:$true] %s605
          %611 = dma.vmem_to_hbm [thread:$0]  %s604, 1024, %s606, %s591, 256, 256, 16
        $region56: #{tpu_custom_call.1} parent=47 // pred_fallthru
          _
      $region48: #{tpu_custom_call.1} parent=5 // pred_fallthru
        _
      %p612 = scmp.le.s32.totalorder 2, %s20
      // Predicated region
      $region57: #{tpu_custom_call.1} parent=5 // pred_check
        %p613 = pneg %p612
      $region58: #{tpu_custom_call.1} parent=5 // pred_check_branch
        %615 = sbr.rel (%p613) target = $region60
      $region59: #{tpu_custom_call.1} parent=5 // pred_region
        %s616 = ssub.s32 %s20, 2
        // Predicated region
        $region61: #{tpu_custom_call.1} parent=59 // pred_check
          %p617 = pneg %p201
        $region62: #{tpu_custom_call.1} parent=59 // pred_check_branch
          %619 = sbr.rel (%p617) target = $region64
        $region63: #{tpu_custom_call.1} parent=59 // pred_region
          %s620 = sand.u32 %s186, 1
          %s621 = scalar_lea.sflag [#allocation5], %s620
          %s622 = sand.u32 %s186, 1
          %s623 = smul.addr %s622, 64
          %s624 = scalar_lea.vmem [#allocation6], %s623
          %626 = dma.done %s621, 1024
        $region64: #{tpu_custom_call.1} parent=59 // pred_fallthru
          _
      $region60: #{tpu_custom_call.1} parent=5 // pred_fallthru
        _
    $region6: #{tpu_custom_call.1} parent=1 // loop_footer
      %s24 = sadd.s32 1, %s20
    $region7: #{tpu_custom_call.1} parent=1 // loop_footer_branch
      %19 = sbr.rel target = $region3
    $region8: #{tpu_custom_call.1} parent=1 // loop_exit
      _
    %627 = vsyncpa [#allocation4], 1
    %s628 = scalar_lea.sflag [#allocation4], 1
    %629 = vsyncpa %s628, 1
    %630 = vsyncpa [#allocation5], 1
    %s631 = scalar_lea.sflag [#allocation5], 1
    %632 = vsyncpa %s631, 1

</llo_original>
